<compile_context>
chip_gen: v7x
topology: tpu7x:2x2x1
jax: 0.10.0
libtpu: 0.0.40
codegen_flags: <defaults>
</compile_context>

<pallas_src>
import jax
import jax.numpy as jnp
from jax.experimental import pallas as pl
from jax.experimental.pallas import tpu as pltpu

EPS = 1e-5
MAX_TILE_ROWS = 512  # v7x-safe: 2*(in+out) tiles << 64 MiB VMEM


def layernorm_kernel(x_ref, g_ref, b_ref, o_ref):
    # x_ref: (tile_rows, C); g_ref, b_ref: (1, C)
    x = x_ref[...].astype(jnp.float32)
    inv_c = jnp.float32(1.0 / x.shape[-1])  # compile-time constant

    # Issue both lane reductions before any dependent VPU work (ILP for XLU/VPU).
    s = jnp.sum(x, axis=-1, keepdims=True)
    sq = jnp.sum(x * x, axis=-1, keepdims=True)

    mean = s * inv_c
    var = sq * inv_c - mean * mean
    inv = jax.lax.rsqrt(var + EPS)

    g = g_ref[...].astype(jnp.float32)
    b = b_ref[...].astype(jnp.float32)
    y = (x - mean) * inv * g + b
    o_ref[...] = y.astype(o_ref.dtype)


def layernorm_pallas(x, gamma, beta):
    """LayerNorm over the last axis of x (any leading shape), eps=1e-5."""
    orig_shape = x.shape
    C = orig_shape[-1]
    rows = int(x.size // C)
    x2 = x.reshape(rows, C)
    g2 = gamma.reshape(1, C)
    b2 = beta.reshape(1, C)

    # Row tile: round rows up to the 8-sublane multiple, cap for large inputs.
    rows8 = ((rows + 7) // 8) * 8
    tile_rows = min(rows8, MAX_TILE_ROWS)
    padded_rows = ((rows + tile_rows - 1) // tile_rows) * tile_rows
    if padded_rows != rows:
        # Zero padding is safe: padded rows give rsqrt(eps), no NaN/Inf, and
        # are sliced away below.
        x2 = jnp.pad(x2, ((0, padded_rows - rows), (0, 0)))

    grid = (padded_rows // tile_rows,)

    out = pl.pallas_call(
        layernorm_kernel,
        out_shape=jax.ShapeDtypeStruct((padded_rows, C), x.dtype),
        grid_spec=pltpu.PrefetchScalarGridSpec(
            num_scalar_prefetch=0,
            grid=grid,
            in_specs=[
                pl.BlockSpec((tile_rows, C), lambda i: (i, 0)),
                pl.BlockSpec((1, C), lambda i: (0, 0)),  # gamma stays resident
                pl.BlockSpec((1, C), lambda i: (0, 0)),  # beta stays resident
            ],
            out_specs=pl.BlockSpec((tile_rows, C), lambda i: (i, 0)),
        ),
        compiler_params=pltpu.CompilerParams(
            dimension_semantics=("parallel",),
        ),
    )(x2, g2, b2)

    if padded_rows != rows:
        out = out[:rows]
    return out.reshape(orig_shape)


def _reference_layernorm(x, gamma, beta):
    xf = x.astype(jnp.float32)
    mean = jnp.mean(xf, axis=-1, keepdims=True)
    var = jnp.mean((xf - mean) ** 2, axis=-1, keepdims=True)
    y = (xf - mean) * jax.lax.rsqrt(var + EPS) * gamma + beta
    return y.astype(x.dtype)


if __name__ == "__main__":
    key = jax.random.PRNGKey(0)
    kx, kg, kb, kx2 = jax.random.split(key, 4)

    # Input matching the module's forward: x303 of shape (1, 7, 7, 768)
    x = jax.random.normal(kx, (1, 7, 7, 768), dtype=jnp.float32)

    # LayerNorm((768,), elementwise_affine=True) parameters (PyTorch default is
    # weight=1, bias=0; add small offsets so the affine path is exercised).
    gamma = 1.0 + 0.01 * jax.random.normal(kg, (768,), dtype=jnp.float32)
    beta = 0.01 * jax.random.normal(kb, (768,), dtype=jnp.float32)

    y = layernorm_pallas(x, gamma, beta)
    jax.block_until_ready(y)
    ref = _reference_layernorm(x, gamma, beta)
    assert jnp.allclose(y, ref, atol=1e-4, rtol=1e-4), "mismatch vs reference (49x768)"

    # Also exercise the tiled / padded multi-step grid path (784 rows -> 2 tiles).
    x_big = jax.random.normal(kx2, (1, 28, 28, 768), dtype=jnp.float32)
    y_big = layernorm_pallas(x_big, gamma, beta)
    jax.block_until_ready(y_big)
    ref_big = _reference_layernorm(x_big, gamma, beta)
    assert jnp.allclose(y_big, ref_big, atol=1e-4, rtol=1e-4), "mismatch vs reference (784x768)"

    print("KERNEL_OK")
</pallas_src>

<mosaic_0001>
module attributes {stable_mosaic.version = 11 : i64} {
  func.func @layernorm_kernel(%arg0: i32, %arg1: memref<56x768xf32, #tpu.memory_space<vmem>>, %arg2: memref<1x768xf32, #tpu.memory_space<vmem>>, %arg3: memref<1x768xf32, #tpu.memory_space<vmem>>, %arg4: memref<56x768xf32, #tpu.memory_space<vmem>>) attributes {dimension_semantics = [#tpu.dimension_semantics<parallel>], iteration_bounds = array<i64: 1>, scalar_prefetch = 0 : i64, scratch_operands = 0 : i64, tpu.core_type = #tpu.core_type<tc>, window_params = [{transform_indices = @transform_0, window_bounds = array<i64: 56, 768>}, {pipeline_mode = #tpu.pipeline_mode<synchronous>, transform_indices = @transform_1, window_bounds = array<i64: 1, 768>}, {pipeline_mode = #tpu.pipeline_mode<synchronous>, transform_indices = @transform_2, window_bounds = array<i64: 1, 768>}, {transform_indices = @transform_3, window_bounds = array<i64: 56, 768>}]} {
    %c0 = arith.constant 0 : index
    %c0_0 = arith.constant 0 : index
    %0 = vector.load %arg1[%c0, %c0_0] : memref<56x768xf32, #tpu.memory_space<vmem>>, vector<56x768xf32>
    %cst = arith.constant dense<0.000000e+00> : vector<56xf32>
    %1 = vector.multi_reduction <add>, %0, %cst [1] : vector<56x768xf32> to vector<56xf32>
    %2 = vector.shape_cast %1 : vector<56xf32> to vector<56x1xf32>
    %3 = arith.mulf %0, %0 : vector<56x768xf32>
    %cst_1 = arith.constant dense<0.000000e+00> : vector<56xf32>
    %4 = vector.multi_reduction <add>, %3, %cst_1 [1] : vector<56x768xf32> to vector<56xf32>
    %5 = vector.shape_cast %4 : vector<56xf32> to vector<56x1xf32>
    %cst_2 = arith.constant 0.00130208337 : f32
    %6 = vector.broadcast %cst_2 : f32 to vector<56x1xf32>
    %7 = arith.mulf %2, %6 : vector<56x1xf32>
    %cst_3 = arith.constant 0.00130208337 : f32
    %8 = vector.broadcast %cst_3 : f32 to vector<56x1xf32>
    %9 = arith.mulf %5, %8 : vector<56x1xf32>
    %10 = arith.mulf %7, %7 : vector<56x1xf32>
    %11 = arith.subf %9, %10 : vector<56x1xf32>
    %cst_4 = arith.constant 9.99999974E-6 : f32
    %12 = vector.broadcast %cst_4 : f32 to vector<56x1xf32>
    %13 = arith.addf %11, %12 : vector<56x1xf32>
    %14 = math.rsqrt %13 : vector<56x1xf32>
    %c0_5 = arith.constant 0 : index
    %c0_6 = arith.constant 0 : index
    %15 = vector.load %arg2[%c0_5, %c0_6] : memref<1x768xf32, #tpu.memory_space<vmem>>, vector<1x768xf32>
    %c0_7 = arith.constant 0 : index
    %c0_8 = arith.constant 0 : index
    %16 = vector.load %arg3[%c0_7, %c0_8] : memref<1x768xf32, #tpu.memory_space<vmem>>, vector<1x768xf32>
    %17 = vector.broadcast %7 : vector<56x1xf32> to vector<56x768xf32>
    %18 = arith.subf %0, %17 : vector<56x768xf32>
    %19 = vector.broadcast %14 : vector<56x1xf32> to vector<56x768xf32>
    %20 = arith.mulf %18, %19 : vector<56x768xf32>
    %21 = vector.broadcast %15 : vector<1x768xf32> to vector<56x768xf32>
    %22 = arith.mulf %20, %21 : vector<56x768xf32>
    %23 = vector.broadcast %16 : vector<1x768xf32> to vector<56x768xf32>
    %24 = arith.addf %22, %23 : vector<56x768xf32>
    %c0_9 = arith.constant 0 : index
    %c0_10 = arith.constant 0 : index
    %25 = vector.load %arg4[%c0_9, %c0_10] : memref<56x768xf32, #tpu.memory_space<vmem>>, vector<56x768xf32>
    tpu.vector_store %arg4[%c0_9, %c0_10], %24 {strides = array<i32>} : memref<56x768xf32, #tpu.memory_space<vmem>>, vector<56x768xf32>,
    return
  }
  func.func @transform_0(%arg0: i32) -> (i32, i32) {
    %c0_i32 = arith.constant 0 : i32
    %c0_i32_0 = arith.constant 0 : i32
    return %arg0, %c0_i32 : i32, i32
  }
  func.func @transform_1(%arg0: i32) -> (i32, i32) {
    %c0_i32 = arith.constant 0 : i32
    %c0_i32_0 = arith.constant 0 : i32
    %c0_i32_1 = arith.constant 0 : i32
    return %c0_i32, %c0_i32_0 : i32, i32
  }
  func.func @transform_2(%arg0: i32) -> (i32, i32) {
    %c0_i32 = arith.constant 0 : i32
    %c0_i32_0 = arith.constant 0 : i32
    %c0_i32_1 = arith.constant 0 : i32
    return %c0_i32, %c0_i32_0 : i32, i32
  }
  func.func @transform_3(%arg0: i32) -> (i32, i32) {
    %c0_i32 = arith.constant 0 : i32
    %c0_i32_0 = arith.constant 0 : i32
    return %arg0, %c0_i32 : i32, i32
  }
}

</mosaic_0001>

<llo_original>
// kernel: tpu_custom_call.1
$region0: #{tpu_custom_call.1}
  #allocation0 [shape = 'u32[]', space=smem, size = 0x4, offset = 0x4, fixed_abs, tag = 'smem constant byte address 0x4 - core index']
  #allocation1 [shape = 'u32[144,128]{1,0:T(1,128)}', space=vmem, size = 0x12000, scoped, tag = 'internal scratch']
  %s0 = inlined_call_operand.hbm [shape: f32[56,768], index: 0, kind: input, shape index: {}]
  %s1 = inlined_call_operand.hbm [shape: f32[1,768], index: 1, kind: input, shape index: {}]
  %s2 = inlined_call_operand.vmem [shape: f32[1,768], index: 2, kind: input, shape index: {}]
  %s3 = inlined_call_operand.hbm [shape: f32[56,768], index: 3, kind: output, shape index: {}]
  %s4 = sld [smem:[#allocation0]]
  $region30: #{tpu_custom_call.1} parent=0
    _
  %s6 = ssub.s32 1, %s4
  %s7 = scalar_select 0, %s6, %s4
  $region1: #{tpu_custom_call.1} parent=0
    #allocation2 [shape = 'u8[172032]{0}', space=vmem, size = 0x2a000, scoped, tag = 'input window, operand 0, single buffered']
    #allocation3 [shape = 's32[1]{0}', space=sflag, size = 0x4, scoped, tag = 'scoped memory for tpu_custom_call.1']
    #allocation4 [shape = 's32[1]{0}', space=sflag, size = 0x4, scoped, tag = 'scoped memory for tpu_custom_call.1']
    #allocation5 [shape = 'u8[3072]{0}', space=vmem, size = 0xc00, scoped, tag = 'input window, operand 1, single buffered']
    #allocation6 [shape = 's32[1]{0}', space=sflag, size = 0x4, scoped, tag = 'scoped memory for tpu_custom_call.1']
    #allocation7 [shape = 'u8[172032]{0}', space=vmem, size = 0x2a000, scoped, tag = 'output window, operand 0, single buffered']
    %8 = vsyncpa [#allocation3], 0
    %9 = vsyncpa [#allocation6], 0
    %10 = vsyncpa [#allocation4], 0
    // Predicated region
    $region2: #{tpu_custom_call.1} parent=1 // pred_check
      _
    $region3: #{tpu_custom_call.1} parent=1 // pred_check_branch
      %12 = sbr.rel (0) target = $region5
    $region4: #{tpu_custom_call.1} parent=1 // pred_region
      %s14 = ssub.s32 5376, 5376
      %15 = vsyncadd [#allocation3], %s14
      %s16 = sshll.u32 [#allocation2], 4
      %s17 = int_to_ptr.vmem [resolvable:$true] %s16
      %22 = dma.hbm_to_vmem [thread:$0]  %s0, 5376, %s17, [#allocation3], 768, 768, 48
    $region5: #{tpu_custom_call.1} parent=1 // pred_fallthru
      _
    // Predicated region
    $region6: #{tpu_custom_call.1} parent=1 // pred_check
      _
    $region7: #{tpu_custom_call.1} parent=1 // pred_check_branch
      %24 = sbr.rel (0) target = $region9
    $region8: #{tpu_custom_call.1} parent=1 // pred_region
      %s26 = ssub.s32 96, 96
      %27 = vsyncadd [#allocation6], %s26
      %s29 = sshll.u32 [#allocation5], 4
      %s30 = int_to_ptr.vmem [resolvable:$true] %s29
      %32 = dma.hbm_to_vmem [thread:$0]  %s1, 96, %s30, [#allocation6]
    $region9: #{tpu_custom_call.1} parent=1 // pred_fallthru
      _
    // Predicated region
    $region10: #{tpu_custom_call.1} parent=1 // pred_check
      _
    $region11: #{tpu_custom_call.1} parent=1 // pred_check_branch
      %34 = sbr.rel (0) target = $region13
    $region12: #{tpu_custom_call.1} parent=1 // pred_region
      _
    $region13: #{tpu_custom_call.1} parent=1 // pred_fallthru
      _
    // Predicated region
    $region14: #{tpu_custom_call.1} parent=1 // pred_check
      _
    $region15: #{tpu_custom_call.1} parent=1 // pred_check_branch
      %36 = sbr.rel (0) target = $region17
    $region16: #{tpu_custom_call.1} parent=1 // pred_region
      %37 = dma.done [#allocation3], 5376
    $region17: #{tpu_custom_call.1} parent=1 // pred_fallthru
      _
    // Predicated region
    $region18: #{tpu_custom_call.1} parent=1 // pred_check
      _
    $region19: #{tpu_custom_call.1} parent=1 // pred_check_branch
      %39 = sbr.rel (0) target = $region21
    $region20: #{tpu_custom_call.1} parent=1 // pred_region
      %40 = dma.done [#allocation6], 96
    $region21: #{tpu_custom_call.1} parent=1 // pred_fallthru
      _
    %v41 = vld [vmem:[#allocation2] sm:$0xff]
    %v42 = vld [vmem:[#allocation2 + $0x8] sm:$0xff]
    %v43 = vld [vmem:[#allocation2 + $0x10] sm:$0xff]
    %v44 = vld [vmem:[#allocation2 + $0x18] sm:$0xff]
    %v45 = vld [vmem:[#allocation2 + $0x20] sm:$0xff]
    %v46 = vld [vmem:[#allocation2 + $0x28] sm:$0xff]
    %v47 = vld [vmem:[#allocation2 + $0x30] sm:$0xff]
    %v48 = vld [vmem:[#allocation2 + $0x38] sm:$0xff]
    %v49 = vld [vmem:[#allocation2 + $0x40] sm:$0xff]
    %v50 = vld [vmem:[#allocation2 + $0x48] sm:$0xff]
    %v51 = vld [vmem:[#allocation2 + $0x50] sm:$0xff]
    %v52 = vld [vmem:[#allocation2 + $0x58] sm:$0xff]
    %v53 = vld [vmem:[#allocation2 + $0x60] sm:$0xff]
    %v54 = vld [vmem:[#allocation2 + $0x68] sm:$0xff]
    %v55 = vld [vmem:[#allocation2 + $0x70] sm:$0xff]
    %v56 = vld [vmem:[#allocation2 + $0x78] sm:$0xff]
    %v57 = vld [vmem:[#allocation2 + $0x80] sm:$0xff]
    %v58 = vld [vmem:[#allocation2 + $0x88] sm:$0xff]
    %v59 = vld [vmem:[#allocation2 + $0x90] sm:$0xff]
    %v60 = vld [vmem:[#allocation2 + $0x98] sm:$0xff]
    %v61 = vld [vmem:[#allocation2 + $0xa0] sm:$0xff]
    %v62 = vld [vmem:[#allocation2 + $0xa8] sm:$0xff]
    %v63 = vld [vmem:[#allocation2 + $0xb0] sm:$0xff]
    %v64 = vld [vmem:[#allocation2 + $0xb8] sm:$0xff]
    %v65 = vld [vmem:[#allocation2 + $0xc0] sm:$0xff]
    %v66 = vld [vmem:[#allocation2 + $0xc8] sm:$0xff]
    %v67 = vld [vmem:[#allocation2 + $0xd0] sm:$0xff]
    %v68 = vld [vmem:[#allocation2 + $0xd8] sm:$0xff]
    %v69 = vld [vmem:[#allocation2 + $0xe0] sm:$0xff]
    %v70 = vld [vmem:[#allocation2 + $0xe8] sm:$0xff]
    %v71 = vld [vmem:[#allocation2 + $0xf0] sm:$0xff]
    %v72 = vld [vmem:[#allocation2 + $0xf8] sm:$0xff]
    %v73 = vld [vmem:[#allocation2 + $0x100] sm:$0xff]
    %v74 = vld [vmem:[#allocation2 + $0x108] sm:$0xff]
    %v75 = vld [vmem:[#allocation2 + $0x110] sm:$0xff]
    %v76 = vld [vmem:[#allocation2 + $0x118] sm:$0xff]
    %v77 = vld [vmem:[#allocation2 + $0x120] sm:$0xff]
    %v78 = vld [vmem:[#allocation2 + $0x128] sm:$0xff]
    %v79 = vld [vmem:[#allocation2 + $0x130] sm:$0xff]
    %v80 = vld [vmem:[#allocation2 + $0x138] sm:$0xff]
    %v81 = vld [vmem:[#allocation2 + $0x140] sm:$0xff]
    %v82 = vld [vmem:[#allocation2 + $0x148] sm:$0xff]
    %v83 = vadd.f32 %v41, %v42
    %v84 = vadd.f32 %v83, %v43
    %v85 = vadd.f32 %v84, %v44
    %v86 = vadd.f32 %v85, %v45
    %v87 = vadd.f32 %v86, %v46
    %88 = vadd.xlane.f32.xlu0 %v87
    %v89 = vpop.xlane.xlu0 %88
    %v90 = vadd.f32 %v47, %v48
    %v91 = vadd.f32 %v90, %v49
    %v92 = vadd.f32 %v91, %v50
    %v93 = vadd.f32 %v92, %v51
    %v94 = vadd.f32 %v93, %v52
    %95 = vadd.xlane.f32.xlu0 %v94
    %v96 = vpop.xlane.xlu0 %95
    %v97 = vadd.f32 %v53, %v54
    %v98 = vadd.f32 %v97, %v55
    %v99 = vadd.f32 %v98, %v56
    %v100 = vadd.f32 %v99, %v57
    %v101 = vadd.f32 %v100, %v58
    %102 = vadd.xlane.f32.xlu0 %v101
    %v103 = vpop.xlane.xlu0 %102
    %v104 = vadd.f32 %v59, %v60
    %v105 = vadd.f32 %v104, %v61
    %v106 = vadd.f32 %v105, %v62
    %v107 = vadd.f32 %v106, %v63
    %v108 = vadd.f32 %v107, %v64
    %109 = vadd.xlane.f32.xlu0 %v108
    %v110 = vpop.xlane.xlu0 %109
    %v111 = vadd.f32 %v65, %v66
    %v112 = vadd.f32 %v111, %v67
    %v113 = vadd.f32 %v112, %v68
    %v114 = vadd.f32 %v113, %v69
    %v115 = vadd.f32 %v114, %v70
    %116 = vadd.xlane.f32.xlu0 %v115
    %v117 = vpop.xlane.xlu0 %116
    %v118 = vadd.f32 %v71, %v72
    %v119 = vadd.f32 %v118, %v73
    %v120 = vadd.f32 %v119, %v74
    %v121 = vadd.f32 %v120, %v75
    %v122 = vadd.f32 %v121, %v76
    %123 = vadd.xlane.f32.xlu0 %v122
    %v124 = vpop.xlane.xlu0 %123
    %v125 = vadd.f32 %v77, %v78
    %v126 = vadd.f32 %v125, %v79
    %v127 = vadd.f32 %v126, %v80
    %v128 = vadd.f32 %v127, %v81
    %v129 = vadd.f32 %v128, %v82
    %130 = vadd.xlane.f32.xlu0 %v129
    %v131 = vpop.xlane.xlu0 %130
    %v132 = vmul.f32 %v41, %v41
    %v133 = vmul.f32 %v42, %v42
    %v134 = vmul.f32 %v43, %v43
    %v135 = vmul.f32 %v44, %v44
    %v136 = vmul.f32 %v45, %v45
    %v137 = vmul.f32 %v46, %v46
    %v138 = vmul.f32 %v47, %v47
    %v139 = vmul.f32 %v48, %v48
    %v140 = vmul.f32 %v49, %v49
    %v141 = vmul.f32 %v50, %v50
    %v142 = vmul.f32 %v51, %v51
    %v143 = vmul.f32 %v52, %v52
    %v144 = vmul.f32 %v53, %v53
    %v145 = vmul.f32 %v54, %v54
    %v146 = vmul.f32 %v55, %v55
    %v147 = vmul.f32 %v56, %v56
    %v148 = vmul.f32 %v57, %v57
    %v149 = vmul.f32 %v58, %v58
    %v150 = vmul.f32 %v59, %v59
    %v151 = vmul.f32 %v60, %v60
    %v152 = vmul.f32 %v61, %v61
    %v153 = vmul.f32 %v62, %v62
    %v154 = vmul.f32 %v63, %v63
    %v155 = vmul.f32 %v64, %v64
    %v156 = vmul.f32 %v65, %v65
    %v157 = vmul.f32 %v66, %v66
    %v158 = vmul.f32 %v67, %v67
    %v159 = vmul.f32 %v68, %v68
    %v160 = vmul.f32 %v69, %v69
    %v161 = vmul.f32 %v70, %v70
    %v162 = vmul.f32 %v71, %v71
    %v163 = vmul.f32 %v72, %v72
    %v164 = vmul.f32 %v73, %v73
    %v165 = vmul.f32 %v74, %v74
    %v166 = vmul.f32 %v75, %v75
    %v167 = vmul.f32 %v76, %v76
    %v168 = vmul.f32 %v77, %v77
    %v169 = vmul.f32 %v78, %v78
    %v170 = vmul.f32 %v79, %v79
    %v171 = vmul.f32 %v80, %v80
    %v172 = vmul.f32 %v81, %v81
    %v173 = vmul.f32 %v82, %v82
    %v174 = vadd.f32 %v132, %v133
    %v175 = vadd.f32 %v174, %v134
    %v176 = vadd.f32 %v175, %v135
    %v177 = vadd.f32 %v176, %v136
    %v178 = vadd.f32 %v177, %v137
    %179 = vadd.xlane.f32.xlu0 %v178
    %v180 = vpop.xlane.xlu0 %179
    %v181 = vadd.f32 %v138, %v139
    %v182 = vadd.f32 %v181, %v140
    %v183 = vadd.f32 %v182, %v141
    %v184 = vadd.f32 %v183, %v142
    %v185 = vadd.f32 %v184, %v143
    %186 = vadd.xlane.f32.xlu0 %v185
    %v187 = vpop.xlane.xlu0 %186
    %v188 = vadd.f32 %v144, %v145
    %v189 = vadd.f32 %v188, %v146
    %v190 = vadd.f32 %v189, %v147
    %v191 = vadd.f32 %v190, %v148
    %v192 = vadd.f32 %v191, %v149
    %193 = vadd.xlane.f32.xlu0 %v192
    %v194 = vpop.xlane.xlu0 %193
    %v195 = vadd.f32 %v150, %v151
    %v196 = vadd.f32 %v195, %v152
    %v197 = vadd.f32 %v196, %v153
    %v198 = vadd.f32 %v197, %v154
    %v199 = vadd.f32 %v198, %v155
    %200 = vadd.xlane.f32.xlu0 %v199
    %v201 = vpop.xlane.xlu0 %200
    %v202 = vadd.f32 %v156, %v157
    %v203 = vadd.f32 %v202, %v158
    %v204 = vadd.f32 %v203, %v159
    %v205 = vadd.f32 %v204, %v160
    %v206 = vadd.f32 %v205, %v161
    %207 = vadd.xlane.f32.xlu0 %v206
    %v208 = vpop.xlane.xlu0 %207
    %v209 = vadd.f32 %v162, %v163
    %v210 = vadd.f32 %v209, %v164
    %v211 = vadd.f32 %v210, %v165
    %v212 = vadd.f32 %v211, %v166
    %v213 = vadd.f32 %v212, %v167
    %214 = vadd.xlane.f32.xlu0 %v213
    %v215 = vpop.xlane.xlu0 %214
    %v216 = vadd.f32 %v168, %v169
    %v217 = vadd.f32 %v216, %v170
    %v218 = vadd.f32 %v217, %v171
    %v219 = vadd.f32 %v218, %v172
    %v220 = vadd.f32 %v219, %v173
    %221 = vadd.xlane.f32.xlu0 %v220
    %v222 = vpop.xlane.xlu0 %221
    %v223 = vmul.f32 %v89, 0.0013020834
    %v224 = vmul.f32 %v96, 0.0013020834
    %v225 = vmul.f32 %v103, 0.0013020834
    %v226 = vmul.f32 %v110, 0.0013020834
    %v227 = vmul.f32 %v117, 0.0013020834
    %v228 = vmul.f32 %v124, 0.0013020834
    %v229 = vmul.f32 %v131, 0.0013020834
    %v230 = vmul.f32 %v180, 0.0013020834
    %v231 = vmul.f32 %v187, 0.0013020834
    %v232 = vmul.f32 %v194, 0.0013020834
    %v233 = vmul.f32 %v201, 0.0013020834
    %v234 = vmul.f32 %v208, 0.0013020834
    %v235 = vmul.f32 %v215, 0.0013020834
    %v236 = vmul.f32 %v222, 0.0013020834
    %v237 = vmul.f32 %v223, %v223
    %v238 = vmul.f32 %v224, %v224
    %v239 = vmul.f32 %v225, %v225
    %v240 = vmul.f32 %v226, %v226
    %v241 = vmul.f32 %v227, %v227
    %v242 = vmul.f32 %v228, %v228
    %v243 = vmul.f32 %v229, %v229
    %v244 = vsub.f32 %v230, %v237
    %v245 = vsub.f32 %v231, %v238
    %v246 = vsub.f32 %v232, %v239
    %v247 = vsub.f32 %v233, %v240
    %v248 = vsub.f32 %v234, %v241
    %v249 = vsub.f32 %v235, %v242
    %v250 = vsub.f32 %v236, %v243
    %v251 = vadd.f32 %v244, 1e-05
    %v252 = vadd.f32 %v245, 1e-05
    %v253 = vadd.f32 %v246, 1e-05
    %v254 = vadd.f32 %v247, 1e-05
    %v255 = vadd.f32 %v248, 1e-05
    %v256 = vadd.f32 %v249, 1e-05
    %v257 = vadd.f32 %v250, 1e-05
    %v258 = vrsqrt.pop %v251
    %v259 = vrsqrt.pop %v252
    %v260 = vrsqrt.pop %v253
    %v261 = vrsqrt.pop %v254
    %v262 = vrsqrt.pop %v255
    %v263 = vrsqrt.pop %v256
    %v264 = vrsqrt.pop %v257
    %v265 = vld [vmem:[#allocation5] sm:$0x3f]
    %v266 = vld [vmem:[%s2] sm:$0x3f]
    %v267 = vsub.f32 %v41, %v223
    %v268 = vsub.f32 %v42, %v223
    %v269 = vsub.f32 %v43, %v223
    %v270 = vsub.f32 %v44, %v223
    %v271 = vsub.f32 %v45, %v223
    %v272 = vsub.f32 %v46, %v223
    %v273 = vsub.f32 %v47, %v224
    %v274 = vsub.f32 %v48, %v224
    %v275 = vsub.f32 %v49, %v224
    %v276 = vsub.f32 %v50, %v224
    %v277 = vsub.f32 %v51, %v224
    %v278 = vsub.f32 %v52, %v224
    %v279 = vsub.f32 %v53, %v225
    %v280 = vsub.f32 %v54, %v225
    %v281 = vsub.f32 %v55, %v225
    %v282 = vsub.f32 %v56, %v225
    %v283 = vsub.f32 %v57, %v225
    %v284 = vsub.f32 %v58, %v225
    %v285 = vsub.f32 %v59, %v226
    %v286 = vsub.f32 %v60, %v226
    %v287 = vsub.f32 %v61, %v226
    %v288 = vsub.f32 %v62, %v226
    %v289 = vsub.f32 %v63, %v226
    %v290 = vsub.f32 %v64, %v226
    %v291 = vsub.f32 %v65, %v227
    %v292 = vsub.f32 %v66, %v227
    %v293 = vsub.f32 %v67, %v227
    %v294 = vsub.f32 %v68, %v227
    %v295 = vsub.f32 %v69, %v227
    %v296 = vsub.f32 %v70, %v227
    %v297 = vsub.f32 %v71, %v228
    %v298 = vsub.f32 %v72, %v228
    %v299 = vsub.f32 %v73, %v228
    %v300 = vsub.f32 %v74, %v228
    %v301 = vsub.f32 %v75, %v228
    %v302 = vsub.f32 %v76, %v228
    %v303 = vsub.f32 %v77, %v229
    %v304 = vsub.f32 %v78, %v229
    %v305 = vsub.f32 %v79, %v229
    %v306 = vsub.f32 %v80, %v229
    %v307 = vsub.f32 %v81, %v229
    %v308 = vsub.f32 %v82, %v229
    %v309 = vmul.f32 %v267, %v258
    %v310 = vmul.f32 %v268, %v258
    %v311 = vmul.f32 %v269, %v258
    %v312 = vmul.f32 %v270, %v258
    %v313 = vmul.f32 %v271, %v258
    %v314 = vmul.f32 %v272, %v258
    %v315 = vmul.f32 %v273, %v259
    %v316 = vmul.f32 %v274, %v259
    %v317 = vmul.f32 %v275, %v259
    %v318 = vmul.f32 %v276, %v259
    %v319 = vmul.f32 %v277, %v259
    %v320 = vmul.f32 %v278, %v259
    %v321 = vmul.f32 %v279, %v260
    %v322 = vmul.f32 %v280, %v260
    %v323 = vmul.f32 %v281, %v260
    %v324 = vmul.f32 %v282, %v260
    %v325 = vmul.f32 %v283, %v260
    %v326 = vmul.f32 %v284, %v260
    %v327 = vmul.f32 %v285, %v261
    %v328 = vmul.f32 %v286, %v261
    %v329 = vmul.f32 %v287, %v261
    %v330 = vmul.f32 %v288, %v261
    %v331 = vmul.f32 %v289, %v261
    %v332 = vmul.f32 %v290, %v261
    %v333 = vmul.f32 %v291, %v262
    %v334 = vmul.f32 %v292, %v262
    %v335 = vmul.f32 %v293, %v262
    %v336 = vmul.f32 %v294, %v262
    %v337 = vmul.f32 %v295, %v262
    %v338 = vmul.f32 %v296, %v262
    %v339 = vmul.f32 %v297, %v263
    %v340 = vmul.f32 %v298, %v263
    %v341 = vmul.f32 %v299, %v263
    %v342 = vmul.f32 %v300, %v263
    %v343 = vmul.f32 %v301, %v263
    %v344 = vmul.f32 %v302, %v263
    %v345 = vmul.f32 %v303, %v264
    %v346 = vmul.f32 %v304, %v264
    %v347 = vmul.f32 %v305, %v264
    %v348 = vmul.f32 %v306, %v264
    %v349 = vmul.f32 %v307, %v264
    %v350 = vmul.f32 %v308, %v264
    %v352 = vlaneseq
    %v353 = vshrl.u32 %v352, 7
    %v354 = vsub.s32 0, %v353
    %v355 = vrot.slane %v265, %v354
    %v356 = vlaneseq
    %v357 = vshrl.u32 %v356, 7
    %v358 = vsub.s32 1, %v357
    %v359 = vrot.slane %v265, %v358
    %v360 = vlaneseq
    %v361 = vshrl.u32 %v360, 7
    %v362 = vsub.s32 2, %v361
    %v363 = vrot.slane %v265, %v362
    %v364 = vlaneseq
    %v365 = vshrl.u32 %v364, 7
    %v366 = vsub.s32 3, %v365
    %v367 = vrot.slane %v265, %v366
    %v368 = vlaneseq
    %v369 = vshrl.u32 %v368, 7
    %v370 = vsub.s32 4, %v369
    %v371 = vrot.slane %v265, %v370
    %v372 = vlaneseq
    %v373 = vshrl.u32 %v372, 7
    %v374 = vsub.s32 5, %v373
    %v375 = vrot.slane %v265, %v374
    %v382 = vmul.f32 %v309, %v355
    %v383 = vmul.f32 %v310, %v359
    %v384 = vmul.f32 %v311, %v363
    %v385 = vmul.f32 %v312, %v367
    %v386 = vmul.f32 %v313, %v371
    %v387 = vmul.f32 %v314, %v375
    %v388 = vmul.f32 %v315, %v355
    %v389 = vmul.f32 %v316, %v359
    %v390 = vmul.f32 %v317, %v363
    %v391 = vmul.f32 %v318, %v367
    %v392 = vmul.f32 %v319, %v371
    %v393 = vmul.f32 %v320, %v375
    %v394 = vmul.f32 %v321, %v355
    %v395 = vmul.f32 %v322, %v359
    %v396 = vmul.f32 %v323, %v363
    %v397 = vmul.f32 %v324, %v367
    %v398 = vmul.f32 %v325, %v371
    %v399 = vmul.f32 %v326, %v375
    %v400 = vmul.f32 %v327, %v355
    %v401 = vmul.f32 %v328, %v359
    %v402 = vmul.f32 %v329, %v363
    %v403 = vmul.f32 %v330, %v367
    %v404 = vmul.f32 %v331, %v371
    %v405 = vmul.f32 %v332, %v375
    %v406 = vmul.f32 %v333, %v355
    %v407 = vmul.f32 %v334, %v359
    %v408 = vmul.f32 %v335, %v363
    %v409 = vmul.f32 %v336, %v367
    %v410 = vmul.f32 %v337, %v371
    %v411 = vmul.f32 %v338, %v375
    %v412 = vmul.f32 %v339, %v355
    %v413 = vmul.f32 %v340, %v359
    %v414 = vmul.f32 %v341, %v363
    %v415 = vmul.f32 %v342, %v367
    %v416 = vmul.f32 %v343, %v371
    %v417 = vmul.f32 %v344, %v375
    %v418 = vmul.f32 %v345, %v355
    %v419 = vmul.f32 %v346, %v359
    %v420 = vmul.f32 %v347, %v363
    %v421 = vmul.f32 %v348, %v367
    %v422 = vmul.f32 %v349, %v371
    %v423 = vmul.f32 %v350, %v375
    %v425 = vlaneseq
    %v426 = vshrl.u32 %v425, 7
    %v427 = vsub.s32 0, %v426
    %v428 = vrot.slane %v266, %v427
    %v429 = vlaneseq
    %v430 = vshrl.u32 %v429, 7
    %v431 = vsub.s32 1, %v430
    %v432 = vrot.slane %v266, %v431
    %v433 = vlaneseq
    %v434 = vshrl.u32 %v433, 7
    %v435 = vsub.s32 2, %v434
    %v436 = vrot.slane %v266, %v435
    %v437 = vlaneseq
    %v438 = vshrl.u32 %v437, 7
    %v439 = vsub.s32 3, %v438
    %v440 = vrot.slane %v266, %v439
    %v441 = vlaneseq
    %v442 = vshrl.u32 %v441, 7
    %v443 = vsub.s32 4, %v442
    %v444 = vrot.slane %v266, %v443
    %v445 = vlaneseq
    %v446 = vshrl.u32 %v445, 7
    %v447 = vsub.s32 5, %v446
    %v448 = vrot.slane %v266, %v447
    %v455 = vadd.f32 %v382, %v428
    %v456 = vadd.f32 %v383, %v432
    %v457 = vadd.f32 %v384, %v436
    %v458 = vadd.f32 %v385, %v440
    %v459 = vadd.f32 %v386, %v444
    %v460 = vadd.f32 %v387, %v448
    %v461 = vadd.f32 %v388, %v428
    %v462 = vadd.f32 %v389, %v432
    %v463 = vadd.f32 %v390, %v436
    %v464 = vadd.f32 %v391, %v440
    %v465 = vadd.f32 %v392, %v444
    %v466 = vadd.f32 %v393, %v448
    %v467 = vadd.f32 %v394, %v428
    %v468 = vadd.f32 %v395, %v432
    %v469 = vadd.f32 %v396, %v436
    %v470 = vadd.f32 %v397, %v440
    %v471 = vadd.f32 %v398, %v444
    %v472 = vadd.f32 %v399, %v448
    %v473 = vadd.f32 %v400, %v428
    %v474 = vadd.f32 %v401, %v432
    %v475 = vadd.f32 %v402, %v436
    %v476 = vadd.f32 %v403, %v440
    %v477 = vadd.f32 %v404, %v444
    %v478 = vadd.f32 %v405, %v448
    %v479 = vadd.f32 %v406, %v428
    %v480 = vadd.f32 %v407, %v432
    %v481 = vadd.f32 %v408, %v436
    %v482 = vadd.f32 %v409, %v440
    %v483 = vadd.f32 %v410, %v444
    %v484 = vadd.f32 %v411, %v448
    %v485 = vadd.f32 %v412, %v428
    %v486 = vadd.f32 %v413, %v432
    %v487 = vadd.f32 %v414, %v436
    %v488 = vadd.f32 %v415, %v440
    %v489 = vadd.f32 %v416, %v444
    %v490 = vadd.f32 %v417, %v448
    %v491 = vadd.f32 %v418, %v428
    %v492 = vadd.f32 %v419, %v432
    %v493 = vadd.f32 %v420, %v436
    %v494 = vadd.f32 %v421, %v440
    %v495 = vadd.f32 %v422, %v444
    %v496 = vadd.f32 %v423, %v448
    %497 = vst [vmem:[#allocation7] sm:$0xff] %v455
    %498 = vst [vmem:[#allocation7 + $0x8] sm:$0xff] %v456
    %499 = vst [vmem:[#allocation7 + $0x10] sm:$0xff] %v457
    %500 = vst [vmem:[#allocation7 + $0x18] sm:$0xff] %v458
    %501 = vst [vmem:[#allocation7 + $0x20] sm:$0xff] %v459
    %502 = vst [vmem:[#allocation7 + $0x28] sm:$0xff] %v460
    %503 = vst [vmem:[#allocation7 + $0x30] sm:$0xff] %v461
    %504 = vst [vmem:[#allocation7 + $0x38] sm:$0xff] %v462
    %505 = vst [vmem:[#allocation7 + $0x40] sm:$0xff] %v463
    %506 = vst [vmem:[#allocation7 + $0x48] sm:$0xff] %v464
    %507 = vst [vmem:[#allocation7 + $0x50] sm:$0xff] %v465
    %508 = vst [vmem:[#allocation7 + $0x58] sm:$0xff] %v466
    %509 = vst [vmem:[#allocation7 + $0x60] sm:$0xff] %v467
    %510 = vst [vmem:[#allocation7 + $0x68] sm:$0xff] %v468
    %511 = vst [vmem:[#allocation7 + $0x70] sm:$0xff] %v469
    %512 = vst [vmem:[#allocation7 + $0x78] sm:$0xff] %v470
    %513 = vst [vmem:[#allocation7 + $0x80] sm:$0xff] %v471
    %514 = vst [vmem:[#allocation7 + $0x88] sm:$0xff] %v472
    %515 = vst [vmem:[#allocation7 + $0x90] sm:$0xff] %v473
    %516 = vst [vmem:[#allocation7 + $0x98] sm:$0xff] %v474
    %517 = vst [vmem:[#allocation7 + $0xa0] sm:$0xff] %v475
    %518 = vst [vmem:[#allocation7 + $0xa8] sm:$0xff] %v476
    %519 = vst [vmem:[#allocation7 + $0xb0] sm:$0xff] %v477
    %520 = vst [vmem:[#allocation7 + $0xb8] sm:$0xff] %v478
    %521 = vst [vmem:[#allocation7 + $0xc0] sm:$0xff] %v479
    %522 = vst [vmem:[#allocation7 + $0xc8] sm:$0xff] %v480
    %523 = vst [vmem:[#allocation7 + $0xd0] sm:$0xff] %v481
    %524 = vst [vmem:[#allocation7 + $0xd8] sm:$0xff] %v482
    %525 = vst [vmem:[#allocation7 + $0xe0] sm:$0xff] %v483
    %526 = vst [vmem:[#allocation7 + $0xe8] sm:$0xff] %v484
    %527 = vst [vmem:[#allocation7 + $0xf0] sm:$0xff] %v485
    %528 = vst [vmem:[#allocation7 + $0xf8] sm:$0xff] %v486
    %529 = vst [vmem:[#allocation7 + $0x100] sm:$0xff] %v487
    %530 = vst [vmem:[#allocation7 + $0x108] sm:$0xff] %v488
    %531 = vst [vmem:[#allocation7 + $0x110] sm:$0xff] %v489
    %532 = vst [vmem:[#allocation7 + $0x118] sm:$0xff] %v490
    %533 = vst [vmem:[#allocation7 + $0x120] sm:$0xff] %v491
    %534 = vst [vmem:[#allocation7 + $0x128] sm:$0xff] %v492
    %535 = vst [vmem:[#allocation7 + $0x130] sm:$0xff] %v493
    %536 = vst [vmem:[#allocation7 + $0x138] sm:$0xff] %v494
    %537 = vst [vmem:[#allocation7 + $0x140] sm:$0xff] %v495
    %538 = vst [vmem:[#allocation7 + $0x148] sm:$0xff] %v496
    // Predicated region
    $region22: #{tpu_custom_call.1} parent=1 // pred_check
      _
    $region23: #{tpu_custom_call.1} parent=1 // pred_check_branch
      %540 = sbr.rel (0) target = $region25
    $region24: #{tpu_custom_call.1} parent=1 // pred_region
      %s542 = ssub.s32 5376, 5376
      %543 = vsyncadd [#allocation4], %s542
      %s544 = sshll.u32 [#allocation7], 4
      %s545 = int_to_ptr.vmem [resolvable:$true] %s544
      %550 = dma.vmem_to_hbm [thread:$0]  %s545, 5376, %s3, [#allocation4], 768, 768, 48
    $region25: #{tpu_custom_call.1} parent=1 // pred_fallthru
      _
    // Predicated region
    $region26: #{tpu_custom_call.1} parent=1 // pred_check
      _
    $region27: #{tpu_custom_call.1} parent=1 // pred_check_branch
      %552 = sbr.rel (0) target = $region29
    $region28: #{tpu_custom_call.1} parent=1 // pred_region
      %553 = dma.done [#allocation4], 5376
    $region29: #{tpu_custom_call.1} parent=1 // pred_fallthru
      _
    %554 = vsyncpa [#allocation3], 1
    %555 = vsyncpa [#allocation6], 1
    %556 = vsyncpa [#allocation4], 1

</llo_original>
